<compile_context>
chip_gen: v5e
topology: v5e:2x2
jax: 0.10.0
libtpu: 0.0.40
codegen_flags: <defaults>
</compile_context>

<pallas_src>
import functools

import jax
import jax.numpy as jnp
from jax.experimental import pallas as pl
from jax.experimental.pallas import tpu as pltpu

GIN_EPS = 0.0        # GINConv default eps (train_eps=False)
BN_EPS = 1e-5        # BatchNorm1d default eps
LANE = 128


def _pick_tm(n):
    """Largest row-tile from a friendly list that divides n (and fits VMEM easily)."""
    for c in (512, 256, 128, 64, 32, 16, 8):
        if n % c == 0:
            return c
    return n


# ---------------- Pass 0: xw1 = x @ W1 (lane-dense projection) ----------------
def xw1_kernel(x_ref, w1_ref, o_ref):
    o_ref[...] = jnp.dot(x_ref[...], w1_ref[...],
                         preferred_element_type=jnp.float32)


# ---- Pass 1: row-tiled aggregation + MLP + outer ReLU + BN partial stats ----
def gin_agg_mlp_kernel(a_ref, xw1_ref, b1_ref, w2_ref, b2_ref,
                       h3_ref, sum_ref, sq_ref):
    i = pl.program_id(0)
    tm = a_ref.shape[0]

    # Aggregation: A_tile (bf16 in HBM, f32 in VMEM) @ xW1 (resident, f32).
    a = a_ref[...].astype(jnp.float32)                              # (TM, N)
    agg = jnp.dot(a, xw1_ref[...], preferred_element_type=jnp.float32)  # (TM, Hp)

    # Self term: this tile's own rows of xW1 (reassociated (1+eps)*x term).
    row0 = pl.multiple_of(i * tm, tm)
    self_w = xw1_ref[pl.ds(row0, tm), :]                            # (TM, Hp)

    # MLP: (+b1) -> ReLU -> Linear(H,H) (+b2), then outer ReLU.
    h1 = jnp.maximum(agg + (1.0 + GIN_EPS) * self_w + b1_ref[...], 0.0)
    h2 = jnp.dot(h1, w2_ref[...], preferred_element_type=jnp.float32) + b2_ref[...]
    h3 = jnp.maximum(h2, 0.0)                                       # (TM, Hp)
    h3_ref[...] = h3

    # BatchNorm partial statistics, accumulated in resident (1, Hp) outputs.
    @pl.when(i == 0)
    def _():
        sum_ref[...] = jnp.zeros_like(sum_ref)
        sq_ref[...] = jnp.zeros_like(sq_ref)

    sum_ref[...] += jnp.sum(h3, axis=0, keepdims=True)
    sq_ref[...] += jnp.sum(h3 * h3, axis=0, keepdims=True)


# ---------------- Pass 2: apply BatchNorm (training-mode stats) ----------------
def bn_apply_kernel(n, h3_ref, sum_ref, sq_ref, gamma_ref, beta_ref, o_ref):
    inv_n = 1.0 / n
    mean = sum_ref[...] * inv_n                                     # (1, Hp)
    var = jnp.maximum(sq_ref[...] * inv_n - mean * mean, 0.0)       # biased var
    inv_std = jax.lax.rsqrt(var + BN_EPS)
    o_ref[...] = gamma_ref[...] * (h3_ref[...] - mean) * inv_std + beta_ref[...]


def gin_block(adj, x, w1, b1, w2, b2, gamma, beta, *, tm=None):
    n, indim = x.shape
    hidden = w2.shape[1]
    hp = ((hidden + LANE - 1) // LANE) * LANE   # lane-dense padded hidden

    if tm is None:
        tm = _pick_tm(n)
    assert n % tm == 0, "row tile must divide the node count"
    grid = n // tm

    # Pad parameters to Hp lanes. Zero padding keeps padded output columns at 0
    # (they are sliced off at the end) and never produces NaN in BN.
    def pad_cols(a):
        a = a.reshape(1, -1) if a.ndim == 1 else a
        return jnp.pad(a, ((0, 0), (0, hp - a.shape[-1])))

    w1p = jnp.pad(w1, ((0, 0), (0, hp - w1.shape[1])))
    w2p = jnp.pad(w2, ((0, hp - w2.shape[0]), (0, hp - w2.shape[1])))
    b1p, b2p, gp, bp = pad_cols(b1), pad_cols(b2), pad_cols(gamma), pad_cols(beta)

    # bf16 adjacency in HBM: edge multiplicities are small integers -> exact.
    adj_bf16 = adj.astype(jnp.bfloat16)

    # ---- Pass 0: xw1 = x @ W1 ----
    xw1 = pl.pallas_call(
        xw1_kernel,
        out_shape=jax.ShapeDtypeStruct((n, hp), jnp.float32),
        grid=(grid,),
        in_specs=[pl.BlockSpec((tm, indim), lambda i: (i, 0)),
                  pl.BlockSpec((indim, hp), lambda i: (0, 0))],
        out_specs=pl.BlockSpec((tm, hp), lambda i: (i, 0)),
        compiler_params=pltpu.CompilerParams(
            dimension_semantics=("parallel",)),
    )(x, w1p)

    # ---- Pass 1: aggregation + MLP + ReLU + BN partial sums ----
    h3, s, sq = pl.pallas_call(
        gin_agg_mlp_kernel,
        out_shape=(jax.ShapeDtypeStruct((n, hp), jnp.float32),
                   jax.ShapeDtypeStruct((1, hp), jnp.float32),
                   jax.ShapeDtypeStruct((1, hp), jnp.float32)),
        grid=(grid,),
        in_specs=[pl.BlockSpec((tm, n), lambda i: (i, 0)),     # adj row tile (bf16)
                  pl.BlockSpec((n, hp), lambda i: (0, 0)),     # xW1, resident
                  pl.BlockSpec((1, hp), lambda i: (0, 0)),     # b1, resident
                  pl.BlockSpec((hp, hp), lambda i: (0, 0)),    # W2, resident
                  pl.BlockSpec((1, hp), lambda i: (0, 0))],    # b2, resident
        out_specs=(pl.BlockSpec((tm, hp), lambda i: (i, 0)),   # h3 row tile
                   pl.BlockSpec((1, hp), lambda i: (0, 0)),    # sum accumulator
                   pl.BlockSpec((1, hp), lambda i: (0, 0))),   # sumsq accumulator
        compiler_params=pltpu.CompilerParams(
            # Sequential: the BN accumulators are carried across row tiles.
            dimension_semantics=("arbitrary",),
            vmem_limit_bytes=32 * 1024 * 1024),
    )(adj_bf16, xw1, b1p, w2p, b2p)

    # ---- Pass 2: BatchNorm apply (independent row tiles -> "parallel") ----
    y = pl.pallas_call(
        functools.partial(bn_apply_kernel, float(n)),
        out_shape=jax.ShapeDtypeStruct((n, hp), jnp.float32),
        grid=(grid,),
        in_specs=[pl.BlockSpec((tm, hp), lambda i: (i, 0)),
                  pl.BlockSpec((1, hp), lambda i: (0, 0)),
                  pl.BlockSpec((1, hp), lambda i: (0, 0)),
                  pl.BlockSpec((1, hp), lambda i: (0, 0)),
                  pl.BlockSpec((1, hp), lambda i: (0, 0))],
        out_specs=pl.BlockSpec((tm, hp), lambda i: (i, 0)),
        compiler_params=pltpu.CompilerParams(
            dimension_semantics=("parallel",)),
    )(h3, s, sq, gp, bp)

    return y[:, :hidden]


def reference(adj, x, w1, b1, w2, b2, gamma, beta):
    agg = adj @ x
    h = agg + (1.0 + GIN_EPS) * x
    h1 = jnp.maximum(h @ w1 + b1, 0.0)
    h3 = jnp.maximum(h1 @ w2 + b2, 0.0)
    mean = jnp.mean(h3, axis=0, keepdims=True)
    var = jnp.mean((h3 - mean) ** 2, axis=0, keepdims=True)
    return gamma * (h3 - mean) / jnp.sqrt(var + BN_EPS) + beta


if __name__ == "__main__":
    key = jax.random.PRNGKey(0)
    N, E = 256, 1024          # nodes, edges
    INDIM, HIDDEN = 16, 32

    k_x, k_e, k_w1, k_b1, k_w2, k_b2 = jax.random.split(key, 6)

    # node features and a small random directed graph
    x = jax.random.normal(k_x, (N, INDIM), dtype=jnp.float32)
    edge_index = jax.random.randint(k_e, (2, E), 0, N, dtype=jnp.int32)
    edge_attr = jnp.ones((E, 1), dtype=jnp.float32)   # unused by GINBlock.forward

    # glue: dense adjacency A[dst, src] += 1 per edge (source_to_target flow)
    src, dst = edge_index[0], edge_index[1]
    adj = jnp.zeros((N, N), dtype=jnp.float32).at[dst, src].add(1.0)

    # deterministic params (Linear(indim,H), Linear(H,H), BatchNorm1d(H))
    w1 = jax.random.normal(k_w1, (INDIM, HIDDEN), dtype=jnp.float32) * 0.1
    b1 = jax.random.normal(k_b1, (1, HIDDEN), dtype=jnp.float32) * 0.1
    w2 = jax.random.normal(k_w2, (HIDDEN, HIDDEN), dtype=jnp.float32) * 0.1
    b2 = jax.random.normal(k_b2, (1, HIDDEN), dtype=jnp.float32) * 0.1
    gamma = jnp.ones((1, HIDDEN), dtype=jnp.float32)   # BN weight
    beta = jnp.zeros((1, HIDDEN), dtype=jnp.float32)   # BN bias

    out = gin_block(adj, x, w1, b1, w2, b2, gamma, beta, tm=128)
    out = jax.block_until_ready(out)

    ref = reference(adj, x, w1, b1, w2, b2, gamma, beta)
    assert out.shape == (N, HIDDEN)
    assert jnp.allclose(out, ref, atol=1e-3, rtol=1e-3), "mismatch vs reference"

    print("KERNEL_OK")
</pallas_src>

<mosaic_0001>
module attributes {stable_mosaic.version = 11 : i64} {
  func.func @xw1_kernel(%arg0: i32, %arg1: memref<128x16xf32, #tpu.memory_space<vmem>>, %arg2: memref<16x128xf32, #tpu.memory_space<vmem>>, %arg3: memref<128x128xf32, #tpu.memory_space<vmem>>) attributes {dimension_semantics = [#tpu.dimension_semantics<parallel>], iteration_bounds = array<i64: 2>, scalar_prefetch = 0 : i64, scratch_operands = 0 : i64, tpu.core_type = #tpu.core_type<tc>, window_params = [{transform_indices = @transform_0, window_bounds = array<i64: 128, 16>}, {pipeline_mode = #tpu.pipeline_mode<synchronous>, transform_indices = @transform_1, window_bounds = array<i64: 16, 128>}, {transform_indices = @transform_2, window_bounds = array<i64: 128, 128>}]} {
    %c0 = arith.constant 0 : index
    %c0_0 = arith.constant 0 : index
    %0 = vector.load %arg1[%c0, %c0_0] : memref<128x16xf32, #tpu.memory_space<vmem>>, vector<128x16xf32>
    %c0_1 = arith.constant 0 : index
    %c0_2 = arith.constant 0 : index
    %1 = vector.load %arg2[%c0_1, %c0_2] : memref<16x128xf32, #tpu.memory_space<vmem>>, vector<16x128xf32>
    %cst = arith.constant dense<0.000000e+00> : vector<128x128xf32>
    %2 = tpu.matmul %0, %1, %cst {dimension_numbers = #tpu.dot_dimension_numbers<[1], [0], [0], [1], [0, 0, 1, 1], [], []>} : vector<128x16xf32>, vector<16x128xf32>, vector<128x128xf32> -> vector<128x128xf32>
    %c0_3 = arith.constant 0 : index
    %c0_4 = arith.constant 0 : index
    %3 = vector.load %arg3[%c0_3, %c0_4] : memref<128x128xf32, #tpu.memory_space<vmem>>, vector<128x128xf32>
    tpu.vector_store %arg3[%c0_3, %c0_4], %2 {strides = array<i32>} : memref<128x128xf32, #tpu.memory_space<vmem>>, vector<128x128xf32>,
    return
  }
  func.func @transform_0(%arg0: i32) -> (i32, i32) {
    %c0_i32 = arith.constant 0 : i32
    %c0_i32_0 = arith.constant 0 : i32
    return %arg0, %c0_i32 : i32, i32
  }
  func.func @transform_1(%arg0: i32) -> (i32, i32) {
    %c0_i32 = arith.constant 0 : i32
    %c0_i32_0 = arith.constant 0 : i32
    %c0_i32_1 = arith.constant 0 : i32
    return %c0_i32, %c0_i32_0 : i32, i32
  }
  func.func @transform_2(%arg0: i32) -> (i32, i32) {
    %c0_i32 = arith.constant 0 : i32
    %c0_i32_0 = arith.constant 0 : i32
    return %arg0, %c0_i32 : i32, i32
  }
}

</mosaic_0001>

<llo_original>
// kernel: tpu_custom_call.1
$region0: #{tpu_custom_call.1}
  #allocation0 [shape = 'u32[]', space=smem, size = 0x4, offset = 0x4, fixed_abs, tag = 'smem constant byte address 0x4 - core index']
  #allocation1 [shape = 'u32[72,128]{1,0:T(1,128)}', space=vmem, size = 0x9000, scoped, tag = 'internal scratch']
  %s0 = inlined_call_operand.vmem [shape: f32[256,16], index: 0, kind: input, shape index: {}]
  %s1 = inlined_call_operand.vmem [shape: f32[16,128], index: 1, kind: input, shape index: {}]
  %s2 = inlined_call_operand.hbm [shape: f32[256,128], index: 2, kind: output, shape index: {}]
  %s3 = sld [smem:[#allocation0]]
  $region41: #{tpu_custom_call.1} parent=0
    _
  %s5 = ssub.s32 1, %s3
  %s6 = scalar_select 0, %s5, %s3
  $region1: #{tpu_custom_call.1} parent=0
    #allocation2 [shape = 'u8[131072]{0}', space=vmem, size = 0x20000, scoped, tag = 'output window, operand 0']
    #allocation3 [shape = 's32[2]{0}', space=sflag, size = 0x8, scoped, tag = 'scoped memory for tpu_custom_call.1']
    %7 = vsyncpa [#allocation3], 0
    %s8 = scalar_lea.sflag [#allocation3], 1
    %9 = vsyncpa %s8, 0
    loop: start=0, step=1, limit=4
    $region2: #{tpu_custom_call.1} parent=1 // loop_pre_header
      _
    $region3: #{tpu_custom_call.1} parent=1 // loop_header
      %s11 = sphi 0, %s15
      %p12 = scmp.ge.s32.totalorder %s11, 4
      %s21 = sphi 0, %s23
      %s24 = sphi 0, %s21
      %s25 = sphi 0, %s24
      %s41 = sphi 0, %s25
      %s45 = sphi 0, %s45
      %s47 = sphi 0, %s45
      %s48 = sphi 0, %s47
      %s62 = sphi 0, %s48
      %s68 = sphi 0, %s70
      %s71 = sphi 0, %s68
      %s72 = sphi 0, %s71
      %s88 = sphi 0, %s72
    $region4: #{tpu_custom_call.1} parent=1 // loop_header_branch
      %14 = sbr.rel (%p12) target = $region8
    $region5: #{tpu_custom_call.1} parent=1 // loop_body
      %s16 = ssub.s32 %s11, 1
      %s17 = ssub.s32 %s11, 2
      %s18 = sadd.s32 %s11, 1
      %s19 = ssub.s32 %s11, %s18
      %p20 = scmp.eq.s32.totalorder %s19, 0
      %s22 = sadd.s32 %s21, 1
      %s23 = scalar_select %p20, %s21, %s22
      %p26 = pneg %p20
      %p27 = scmp.eq.s32.totalorder %s11, 1
      %p28 = por %p26, %p27
      %p29 = scmp.ne.s32.totalorder %s21, %s24
      %p30 = scmp.eq.s32.totalorder %s11, 0
      %p31 = por %p29, %p30
      %p32 = scmp.ne.s32.totalorder %s21, %s24
      %p33 = scmp.eq.s32.totalorder %s16, 1
      %p34 = por %p32, %p33
      %p35 = scmp.ne.s32.totalorder %s24, %s25
      %p36 = scmp.eq.s32.totalorder %s16, 0
      %p37 = por %p35, %p36
      %p38 = scmp.ne.s32.totalorder %s24, %s25
      %p39 = scmp.eq.s32.totalorder %s17, 1
      %p40 = por %p38, %p39
      %p42 = scmp.ne.s32.totalorder %s25, %s41
      %p43 = scmp.eq.s32.totalorder %s17, 0
      %p44 = por %p42, %p43
      %s46 = sadd.s32 %s45, 1
      %p49 = scmp.eq.s32.totalorder %s11, 1
      %p50 = scmp.ne.s32.totalorder %s45, %s47
      %p51 = scmp.eq.s32.totalorder %s11, 0
      %p52 = por %p50, %p51
      %p53 = scmp.ne.s32.totalorder %s45, %s47
      %p54 = scmp.eq.s32.totalorder %s16, 1
      %p55 = por %p53, %p54
      %p56 = scmp.ne.s32.totalorder %s47, %s48
      %p57 = scmp.eq.s32.totalorder %s16, 0
      %p58 = por %p56, %p57
      %p59 = scmp.ne.s32.totalorder %s47, %s48
      %p60 = scmp.eq.s32.totalorder %s17, 1
      %p61 = por %p59, %p60
      %p63 = scmp.ne.s32.totalorder %s48, %s62
      %p64 = scmp.eq.s32.totalorder %s17, 0
      %p65 = por %p63, %p64
      %s66 = ssub.s32 %s11, %s18
      %p67 = scmp.eq.s32.totalorder %s66, 0
      %s69 = sadd.s32 %s68, 1
      %s70 = scalar_select %p67, %s68, %s69
      %p73 = pneg %p67
      %p74 = scmp.eq.s32.totalorder %s11, 1
      %p75 = por %p73, %p74
      %p76 = scmp.ne.s32.totalorder %s68, %s71
      %p77 = scmp.eq.s32.totalorder %s11, 0
      %p78 = por %p76, %p77
      %p79 = scmp.ne.s32.totalorder %s68, %s71
      %p80 = scmp.eq.s32.totalorder %s16, 1
      %p81 = por %p79, %p80
      %p82 = scmp.ne.s32.totalorder %s71, %s72
      %p83 = scmp.eq.s32.totalorder %s16, 0
      %p84 = por %p82, %p83
      %p85 = scmp.ne.s32.totalorder %s71, %s72
      %p86 = scmp.eq.s32.totalorder %s17, 1
      %p87 = por %p85, %p86
      %p89 = scmp.ne.s32.totalorder %s72, %s88
      %p90 = scmp.eq.s32.totalorder %s17, 0
      %p91 = por %p89, %p90
      %p92 = scmp.le.s32.totalorder 1, %s11
      %p93 = scmp.lt.s32.totalorder %s11, 3
      %p94 = pnand %p92, %p93
      %p95 = pneg %p94
      // Predicated region
      $region9: #{tpu_custom_call.1} parent=5 // pred_check
        _
      $region10: #{tpu_custom_call.1} parent=5 // pred_check_branch
        %97 = sbr.rel (%p94) target = $region12
      $region11: #{tpu_custom_call.1} parent=5 // pred_region
        %s98 = ssub.s32 %s11, 1
        // Predicated region
        $region13: #{tpu_custom_call.1} parent=11 // pred_check
          %p99 = pneg %p58
        $region14: #{tpu_custom_call.1} parent=11 // pred_check_branch
          %101 = sbr.rel (%p99) target = $region16
        $region15: #{tpu_custom_call.1} parent=11 // pred_region
          _
        $region16: #{tpu_custom_call.1} parent=11 // pred_fallthru
          _
      $region12: #{tpu_custom_call.1} parent=5 // pred_fallthru
        _
      %p102 = scmp.lt.s32.totalorder %s11, 2
      // Predicated region
      $region17: #{tpu_custom_call.1} parent=5 // pred_check
        %p103 = pneg %p102
      $region18: #{tpu_custom_call.1} parent=5 // pred_check_branch
        %105 = sbr.rel (%p103) target = $region20
      $region19: #{tpu_custom_call.1} parent=5 // pred_region
        // Predicated region
        $region21: #{tpu_custom_call.1} parent=19 // pred_check
          %p106 = pneg %p31
        $region22: #{tpu_custom_call.1} parent=19 // pred_check_branch
          %108 = sbr.rel (%p106) target = $region24
        $region23: #{tpu_custom_call.1} parent=19 // pred_region
          %s109 = smul.u32 16, %s11
          %p110 = scmp.lt.s32.totalorder %s109, 31
          %s111 = scalar_select %p110, %s109, 31
          %s112 = smul.addr %s111, 8
          %s113 = scalar_lea.vmem %s0, %s112
          %s114 = smul.u32 16, %s11
        $region24: #{tpu_custom_call.1} parent=19 // pred_fallthru
          _
      $region20: #{tpu_custom_call.1} parent=5 // pred_fallthru
        _
      %p115 = scmp.le.s32.totalorder 1, %s11
      %p116 = scmp.lt.s32.totalorder %s11, 3
      %p117 = pnand %p115, %p116
      %p118 = pneg %p117
      // Predicated region
      $region25: #{tpu_custom_call.1} parent=5 // pred_check
        _
      $region26: #{tpu_custom_call.1} parent=5 // pred_check_branch
        %120 = sbr.rel (%p117) target = $region28
      $region27: #{tpu_custom_call.1} parent=5 // pred_region
        %s121 = ssub.s32 %s11, 1
        %s122 = smul.u32 16, %s16
        %p123 = scmp.lt.s32.totalorder %s122, 31
        %s124 = scalar_select %p123, %s122, 31
        %s125 = smul.addr %s124, 8
        %s126 = scalar_lea.vmem %s0, %s125
        %p127 = pneg %p37
        %p128 = pneg %p34
        %p129 = pneg %p58
        %p130 = pneg %p55
        %p131 = pneg %p84
        %p132 = pneg %p81
        %s133 = sand.u32 %s71, 1
        %s134 = scalar_lea.sflag [#allocation3], %s133
        %s135 = sand.u32 %s71, 1
        %s136 = smul.addr %s135, 128
        %s137 = scalar_lea.vmem [#allocation2], %s136
        %s138 = smul.u32 16, %s16
        %p139 = scmp.lt.s32.totalorder %s138, 31
        %s140 = scalar_select %p139, %s138, 31
        %s141 = smul.addr %s140, 8
        %s142 = scalar_lea.vmem %s0, %s141
        %s143 = smul.u32 16, %s16
        %s144 = smul.u32 16, %s16
        %v145 = vld [vmem:[%s142] sm:$0xff]
        %v146 = vld [vmem:[%s142 + $0x8] sm:$0xff]
        %v147 = vld [vmem:[%s142 + $0x10] sm:$0xff]
        %v148 = vld [vmem:[%s142 + $0x18] sm:$0xff]
        %v149 = vld [vmem:[%s142 + $0x20] sm:$0xff]
        %v150 = vld [vmem:[%s142 + $0x28] sm:$0xff]
        %v151 = vld [vmem:[%s142 + $0x30] sm:$0xff]
        %v152 = vld [vmem:[%s142 + $0x38] sm:$0xff]
        %v153 = vld [vmem:[%s142 + $0x40] sm:$0xff]
        %v154 = vld [vmem:[%s142 + $0x48] sm:$0xff]
        %v155 = vld [vmem:[%s142 + $0x50] sm:$0xff]
        %v156 = vld [vmem:[%s142 + $0x58] sm:$0xff]
        %v157 = vld [vmem:[%s142 + $0x60] sm:$0xff]
        %v158 = vld [vmem:[%s142 + $0x68] sm:$0xff]
        %v159 = vld [vmem:[%s142 + $0x70] sm:$0xff]
        %v160 = vld [vmem:[%s142 + $0x78] sm:$0xff]
        %v161 = vld [vmem:[%s1] sm:$0xff]
        %v162 = vld [vmem:[%s1 + $0x8] sm:$0xff]
        %vm163 = vcmask 130048
        %v165 = vsel %vm163, %v145, 0
        %v168 = vsel %vm163, %v146, 0
        %v171 = vsel %vm163, %v147, 0
        %v174 = vsel %vm163, %v148, 0
        %v177 = vsel %vm163, %v149, 0
        %v180 = vsel %vm163, %v150, 0
        %v183 = vsel %vm163, %v151, 0
        %v186 = vsel %vm163, %v152, 0
        %v189 = vsel %vm163, %v153, 0
        %v192 = vsel %vm163, %v154, 0
        %v195 = vsel %vm163, %v155, 0
        %v198 = vsel %vm163, %v156, 0
        %v201 = vsel %vm163, %v157, 0
        %v204 = vsel %vm163, %v158, 0
        %v207 = vsel %vm163, %v159, 0
        %v210 = vsel %vm163, %v160, 0
        %212 = vmatpush.msra.mxu0 0.0
        %213 = vmatpush.msra.mxu0 0.0
        %214 = vmatpush.msra.mxu0 0.0
        %215 = vmatpush.msra.mxu0 0.0
        %216 = vmatpush.msra.mxu0 0.0
        %217 = vmatpush.msra.mxu0 0.0
        %218 = vmatpush.msra.mxu0 0.0
        %219 = vmatpush.msra.mxu0 0.0
        %220 = vmatpush.msra.mxu0 0.0
        %221 = vmatpush.msra.mxu0 0.0
        %222 = vmatpush.msra.mxu0 0.0
        %223 = vmatpush.msra.mxu0 0.0
        %224 = vmatpush.msra.mxu0 0.0
        %225 = vmatpush.msra.mxu0 0.0
        %226 = vmatpush.msra.mxu0 %v162
        %227 = vmatpush.msra.mxu0 %v161
        %228 = vmatmul.f32.gmra.mxu0 %v165
        %v229 = vpop.f32.mrf.mxu0
        %v230 = vadd.f32 0.0, %v229
        %231 = vmatmul.f32.gmra.mxu0 %v168
        %v232 = vpop.f32.mrf.mxu0
        %v233 = vadd.f32 0.0, %v232
        %234 = vmatmul.f32.gmra.mxu0 %v171
        %v235 = vpop.f32.mrf.mxu0
        %v236 = vadd.f32 0.0, %v235
        %237 = vmatmul.f32.gmra.mxu0 %v174
        %v238 = vpop.f32.mrf.mxu0
        %v239 = vadd.f32 0.0, %v238
        %240 = vmatmul.f32.gmra.mxu0 %v177
        %v241 = vpop.f32.mrf.mxu0
        %v242 = vadd.f32 0.0, %v241
        %243 = vmatmul.f32.gmra.mxu0 %v180
        %v244 = vpop.f32.mrf.mxu0
        %v245 = vadd.f32 0.0, %v244
        %246 = vmatmul.f32.gmra.mxu0 %v183
        %v247 = vpop.f32.mrf.mxu0
        %v248 = vadd.f32 0.0, %v247
        %249 = vmatmul.f32.gmra.mxu0 %v186
        %v250 = vpop.f32.mrf.mxu0
        %v251 = vadd.f32 0.0, %v250
        %252 = vmatmul.f32.gmra.mxu0 %v189
        %v253 = vpop.f32.mrf.mxu0
        %v254 = vadd.f32 0.0, %v253
        %255 = vmatmul.f32.gmra.mxu0 %v192
        %v256 = vpop.f32.mrf.mxu0
        %v257 = vadd.f32 0.0, %v256
        %258 = vmatmul.f32.gmra.mxu0 %v195
        %v259 = vpop.f32.mrf.mxu0
        %v260 = vadd.f32 0.0, %v259
        %261 = vmatmul.f32.gmra.mxu0 %v198
        %v262 = vpop.f32.mrf.mxu0
        %v263 = vadd.f32 0.0, %v262
        %264 = vmatmul.f32.gmra.mxu0 %v201
        %v265 = vpop.f32.mrf.mxu0
        %v266 = vadd.f32 0.0, %v265
        %267 = vmatmul.f32.gmra.mxu0 %v204
        %v268 = vpop.f32.mrf.mxu0
        %v269 = vadd.f32 0.0, %v268
        %270 = vmatmul.f32.gmra.mxu0 %v207
        %v271 = vpop.f32.mrf.mxu0
        %v272 = vadd.f32 0.0, %v271
        %273 = vmatmul.f32.gmra.mxu0 %v210
        %v274 = vpop.f32.mrf.mxu0
        %v275 = vadd.f32 0.0, %v274
        %276 = vdwg.mxu0
        %277 = vst [vmem:[%s137] sm:$0xff] %v230
        %278 = vst [vmem:[%s137 + $0x8] sm:$0xff] %v233
        %279 = vst [vmem:[%s137 + $0x10] sm:$0xff] %v236
        %280 = vst [vmem:[%s137 + $0x18] sm:$0xff] %v239
        %281 = vst [vmem:[%s137 + $0x20] sm:$0xff] %v242
        %282 = vst [vmem:[%s137 + $0x28] sm:$0xff] %v245
        %283 = vst [vmem:[%s137 + $0x30] sm:$0xff] %v248
        %284 = vst [vmem:[%s137 + $0x38] sm:$0xff] %v251
        %285 = vst [vmem:[%s137 + $0x40] sm:$0xff] %v254
        %286 = vst [vmem:[%s137 + $0x48] sm:$0xff] %v257
        %287 = vst [vmem:[%s137 + $0x50] sm:$0xff] %v260
        %288 = vst [vmem:[%s137 + $0x58] sm:$0xff] %v263
        %289 = vst [vmem:[%s137 + $0x60] sm:$0xff] %v266
        %290 = vst [vmem:[%s137 + $0x68] sm:$0xff] %v269
        %291 = vst [vmem:[%s137 + $0x70] sm:$0xff] %v272
        %292 = vst [vmem:[%s137 + $0x78] sm:$0xff] %v275
        %s293 = sand.u32 %s71, 1
        %s294 = scalar_lea.sflag [#allocation3], %s293
        %s295 = sand.u32 %s71, 1
        %s296 = smul.addr %s295, 128
        %s297 = scalar_lea.vmem [#allocation2], %s296
        // Predicated region
        $region29: #{tpu_custom_call.1} parent=27 // pred_check
          %p298 = pneg %p81
        $region30: #{tpu_custom_call.1} parent=27 // pred_check_branch
          %300 = sbr.rel (%p298) target = $region32
        $region31: #{tpu_custom_call.1} parent=27 // pred_region
          %s301 = smul.u32 16, %s16
          %303 = vsyncadd %s294, 0
          %s304 = smul.addr %s301, 8
          %s305 = scalar_lea.hbm %s2, %s304
          %s306 = sshll.u32 %s297, 4
          %s307 = int_to_ptr.vmem [resolvable:$true] %s306
          %s308 = sshll.u32 %s305, 4
          %s309 = int_to_ptr.hbm [resolvable:$true] %s308
          %314 = dma.vmem_to_hbm [thread:$0]  %s307, 2048, %s309, %s294, 128, 128, 8
        $region32: #{tpu_custom_call.1} parent=27 // pred_fallthru
          _
      $region28: #{tpu_custom_call.1} parent=5 // pred_fallthru
        _
      %p315 = scmp.le.s32.totalorder 2, %s11
      // Predicated region
      $region33: #{tpu_custom_call.1} parent=5 // pred_check
        %p316 = pneg %p315
      $region34: #{tpu_custom_call.1} parent=5 // pred_check_branch
        %318 = sbr.rel (%p316) target = $region36
      $region35: #{tpu_custom_call.1} parent=5 // pred_region
        %s319 = ssub.s32 %s11, 2
        // Predicated region
        $region37: #{tpu_custom_call.1} parent=35 // pred_check
          %p320 = pneg %p87
        $region38: #{tpu_custom_call.1} parent=35 // pred_check_branch
          %322 = sbr.rel (%p320) target = $region40
        $region39: #{tpu_custom_call.1} parent=35 // pred_region
          %s323 = sand.u32 %s72, 1
          %s324 = scalar_lea.sflag [#allocation3], %s323
          %s325 = sand.u32 %s72, 1
          %s326 = smul.addr %s325, 128
          %s327 = scalar_lea.vmem [#allocation2], %s326
          %329 = dma.done %s324, 2048
        $region40: #{tpu_custom_call.1} parent=35 // pred_fallthru
          _
      $region36: #{tpu_custom_call.1} parent=5 // pred_fallthru
        _
    $region6: #{tpu_custom_call.1} parent=1 // loop_footer
      %s15 = sadd.s32 1, %s11
    $region7: #{tpu_custom_call.1} parent=1 // loop_footer_branch
      %10 = sbr.rel target = $region3
    $region8: #{tpu_custom_call.1} parent=1 // loop_exit
      _
    %330 = vsyncpa [#allocation3], 1
    %s331 = scalar_lea.sflag [#allocation3], 1
    %332 = vsyncpa %s331, 1

</llo_original>
